<compile_context>
chip_gen: v5e
topology: v5e:2x2
jax: 0.10.0
libtpu: 0.0.40
codegen_flags: <defaults>
</compile_context>

<pallas_src>
import functools

import numpy as np
import jax
import jax.numpy as jnp
from jax.experimental import pallas as pl
from jax.experimental.pallas import tpu as pltpu


def _round_up(a, b):
    return (a + b - 1) // b * b


def _cdiv(a, b):
    return (a + b - 1) // b


def _divisor_tile(dim, cap, unit=128):
    """Largest multiple of `unit` that divides `dim` (dim % unit == 0) and <= cap."""
    best = unit
    t = unit
    limit = min(cap, dim)
    while t <= limit:
        if dim % t == 0:
            best = t
        t += unit
    return best


@functools.lru_cache(maxsize=1)
def _vmem_capacity_bytes():
    """Per-generation VMEM capacity (falls back to the smallest, v7x's 64 MiB)."""
    try:
        cap = int(pltpu.get_tpu_info().vmem_capacity_bytes)
        if cap > 0:
            return cap
    except Exception:
        pass
    return 64 << 20


def _choose_tiles(M, Np, Kp, x_bytes, w_bytes, o_bytes, use_scratch, sub,
                  caps, tile_budget):
    cap_m, cap_n, cap_k = caps

    # Split M evenly into ceil(M/cap_m) blocks (minimises zero-pad waste),
    # rounded to the dtype's sublane multiple.
    m_blocks = max(1, _cdiv(M, cap_m))
    tm = max(sub, _round_up(_cdiv(M, m_blocks), sub))

    tn = _divisor_tile(Np, cap_n)
    tk = _divisor_tile(Kp, cap_k)

    def footprint(tm_, tn_, tk_):
        f = 2 * (tm_ * tk_ * x_bytes + tk_ * tn_ * w_bytes + tm_ * tn_ * o_bytes)
        if use_scratch:
            f += tm_ * tn_ * 4
        return f

    # Shrink until the double-buffered working set fits the per-chip budget.
    while footprint(tm, tn, tk) > tile_budget and tk > 128:
        tk = _divisor_tile(Kp, max(128, tk // 2))
    while footprint(tm, tn, tk) > tile_budget and tn > 128:
        tn = _divisor_tile(Np, max(128, tn // 2))
    while footprint(tm, tn, tk) > tile_budget and tm > sub:
        tm = max(sub, _round_up(tm // 2, sub))

    # v7x dual-TensorCore load balance over the parallel (M, N) grid axes:
    # guarantee >= 2 parallel blocks and prefer an even count.
    m_blocks = _cdiv(M, tm)
    n_blocks = Np // tn
    while tn > 128 and (m_blocks * n_blocks < 2 or
                        ((m_blocks * n_blocks) % 2 == 1 and m_blocks * n_blocks < 8)):
        new_tn = _divisor_tile(Np, max(128, tn // 2))
        if new_tn >= tn:
            break
        tn = new_tn
        n_blocks = Np // tn

    return tm, tn, tk


def _make_kernel(has_bias, acc_in_out, precision):
    def _tile_dot(x_tile, w_tile):
        # Cast the x tile to the weight's (MXU) dtype; accumulate in f32.
        return jnp.dot(x_tile.astype(w_tile.dtype), w_tile,
                       preferred_element_type=jnp.float32,
                       precision=precision)

    if acc_in_out and has_bias:
        def kernel(x_ref, w_ref, b_ref, o_ref):
            @pl.when(pl.program_id(2) == 0)
            def _init():  # bias folded into the accumulator init
                o_ref[...] = jnp.broadcast_to(
                    b_ref[...].astype(o_ref.dtype), o_ref.shape)
            o_ref[...] += _tile_dot(x_ref[...], w_ref[...])
    elif acc_in_out:
        def kernel(x_ref, w_ref, o_ref):
            @pl.when(pl.program_id(2) == 0)
            def _init():
                o_ref[...] = jnp.zeros_like(o_ref)
            o_ref[...] += _tile_dot(x_ref[...], w_ref[...])
    elif has_bias:
        def kernel(x_ref, w_ref, b_ref, o_ref, acc_ref):
            @pl.when(pl.program_id(2) == 0)
            def _init():
                acc_ref[...] = jnp.broadcast_to(
                    b_ref[...].astype(jnp.float32), acc_ref.shape)
            acc_ref[...] += _tile_dot(x_ref[...], w_ref[...])

            @pl.when(pl.program_id(2) == pl.num_programs(2) - 1)
            def _finalize():
                o_ref[...] = acc_ref[...].astype(o_ref.dtype)
    else:
        def kernel(x_ref, w_ref, o_ref, acc_ref):
            @pl.when(pl.program_id(2) == 0)
            def _init():
                acc_ref[...] = jnp.zeros_like(acc_ref)
            acc_ref[...] += _tile_dot(x_ref[...], w_ref[...])

            @pl.when(pl.program_id(2) == pl.num_programs(2) - 1)
            def _finalize():
                o_ref[...] = acc_ref[...].astype(o_ref.dtype)

    return kernel


@functools.partial(jax.jit, static_argnames=("out_features", "precision", "tile_caps"))
def column_parallel_linear(x, weight_t, bias=None, *, out_features,
                           precision=None, tile_caps=None):
    """y = x @ weight_t (+ bias).

    weight_t: (Kp, Np) pre-transposed, 128-padded, MXU-dtype weight.
    bias:     (1, Np) f32 padded bias, or None.
    """
    *lead, K = x.shape
    Kp, Np = weight_t.shape
    assert Kp % 128 == 0 and Np % 128 == 0, "weight_t must be 128-padded"
    assert Kp >= K and Np >= out_features

    x2d = x.reshape(-1, K)
    M = x2d.shape[0]

    x_dt = x2d.dtype
    w_dt = weight_t.dtype
    out_dt = x_dt
    x_bytes = jnp.dtype(x_dt).itemsize
    w_bytes = jnp.dtype(w_dt).itemsize
    o_bytes = jnp.dtype(out_dt).itemsize

    # dtype-aware sublane multiple for the M axis.
    sub = {4: 8, 2: 16, 1: 32}.get(x_bytes, 8)

    # f32 output => accumulate directly into o_ref (no scratch / finalize copy).
    acc_in_out = jnp.dtype(out_dt) == jnp.dtype(jnp.float32)
    use_scratch = not acc_in_out

    # Generation-aware VMEM budget (~50 MiB on v7x, ~100 MiB on v5e/v6e).
    capacity = _vmem_capacity_bytes()
    vmem_ceiling = int(capacity * 0.78)
    tile_budget = max(8 << 20, vmem_ceiling - (8 << 20))
    if tile_caps is None:
        cap_k = 4096 if capacity >= (96 << 20) else 2048
        caps = (512, 512, cap_k)
    else:
        caps = tile_caps

    tm, tn, tk = _choose_tiles(M, Np, Kp, x_bytes, w_bytes, o_bytes,
                               use_scratch, sub, caps, tile_budget)

    Mp = _round_up(M, tm)
    if (Mp, Kp) != (M, K):  # skipped entirely on aligned shapes (fast path)
        x2d = jnp.pad(x2d, ((0, Mp - M), (0, Kp - K)))

    grid = (Mp // tm, Np // tn, Kp // tk)
    x_spec = pl.BlockSpec((tm, tk), lambda i, j, k: (i, k))
    w_spec = pl.BlockSpec((tk, tn), lambda i, j, k: (k, j))
    o_spec = pl.BlockSpec((tm, tn), lambda i, j, k: (i, j))

    has_bias = bias is not None
    if has_bias:
        in_specs = [x_spec, w_spec, pl.BlockSpec((1, tn), lambda i, j, k: (0, j))]
        operands = (x2d, weight_t, bias)
    else:
        in_specs = [x_spec, w_spec]
        operands = (x2d, weight_t)

    scratch = [] if acc_in_out else [pltpu.VMEM((tm, tn), jnp.float32)]

    fp = 2 * (tm * tk * x_bytes + tk * tn * w_bytes + tm * tn * o_bytes)
    if use_scratch:
        fp += tm * tn * 4
    vmem_limit = int(min(vmem_ceiling, max(32 << 20, fp + (8 << 20))))

    cost = pl.CostEstimate(
        flops=2 * Mp * Np * Kp,
        transcendentals=0,
        bytes_accessed=(Mp * Kp * x_bytes + Kp * Np * w_bytes + Mp * Np * o_bytes),
    )
    cparams = pltpu.CompilerParams(
        dimension_semantics=("parallel", "parallel", "arbitrary"),
        vmem_limit_bytes=vmem_limit,
    )

    kernel = _make_kernel(has_bias, acc_in_out, precision)

    out2d = pl.pallas_call(
        kernel,
        out_shape=jax.ShapeDtypeStruct((Mp, Np), out_dt),
        grid_spec=pltpu.PrefetchScalarGridSpec(
            num_scalar_prefetch=0, grid=grid,
            in_specs=in_specs, out_specs=o_spec,
            scratch_shapes=scratch),
        compiler_params=cparams,
        cost_estimate=cost,
    )(*operands)

    out2d = out2d[:M, :out_features]
    return out2d.reshape(*lead, out_features)


class ColumnParallelLinearPallas:
    """JAX/Pallas port of ColumnParallelLinear (single process: part = full)."""

    def __init__(self, in_features, out_features, bias=False, dtype=jnp.float32,
                 mxu_dtype=jnp.bfloat16, precision=None, key=None, tile_caps=None):
        if key is None:
            key = jax.random.PRNGKey(0)
        kw, kb = jax.random.split(key)
        self.in_features = in_features
        self.out_features = out_features
        self.part_out_features = out_features
        self.precision = precision
        self.tile_caps = tile_caps

        w = (jax.random.normal(kw, (out_features, in_features), jnp.float32)
             * 0.02).astype(dtype)
        # PyTorch-layout (out, in) parameter kept OFF-device (reference/export
        # only).  The kernel streams a single transposed, 128-padded, MXU-dtype
        # copy: no per-call pad/transpose and no duplicate HBM-resident weight.
        self.weight = np.asarray(w)

        k_pad = _round_up(in_features, 128)
        n_pad = _round_up(out_features, 128)
        w_t = jnp.pad(w.T, ((0, k_pad - in_features), (0, n_pad - out_features)))
        target_dt = mxu_dtype if mxu_dtype is not None else dtype
        self.weight_t = jnp.asarray(w_t.astype(target_dt))  # (Kp, Np)

        if bias:
            b = (jax.random.normal(kb, (out_features,), jnp.float32) * 0.02)
            self.bias = np.asarray(b)
            self.bias_padded = jnp.pad(
                b, (0, n_pad - out_features)).reshape(1, n_pad).astype(jnp.float32)
        else:
            self.bias = None
            self.bias_padded = None
        # TODO(synk): fp8 (v7x) / int8 (v5e/v6e) quantized-weight path with
        # block-wise scales (element_size()==1) not ported; dense path only.

    def __call__(self, x):
        return column_parallel_linear(
            x, self.weight_t, self.bias_padded,
            out_features=self.out_features,
            precision=self.precision,
            tile_caps=self.tile_caps)


if __name__ == "__main__":
    key = jax.random.PRNGKey(0)
    k1, k2, k3, kp1, kp2, kp3 = jax.random.split(key, 6)

    # Case 1: tile-aligned shapes, f32 MXU operands (parity path), no bias.
    b1, s1, in1, out1 = 2, 8, 128, 256
    x1 = jax.random.normal(k1, (b1, s1, in1), dtype=jnp.float32)
    layer1 = ColumnParallelLinearPallas(in1, out1, bias=False, mxu_dtype=None, key=kp1)
    y1 = jax.block_until_ready(layer1(x1))
    y1_ref = jnp.einsum("bsk,nk->bsn", x1, jnp.asarray(layer1.weight))
    assert y1.shape == (b1, s1, out1)
    assert jnp.allclose(y1, y1_ref, atol=1e-3, rtol=1e-3)

    # Case 2: non-divisible M/N/K (padding path) with bias, f32 MXU operands.
    b2, s2, in2, out2 = 2, 7, 96, 200
    x2 = jax.random.normal(k2, (b2, s2, in2), dtype=jnp.float32)
    layer2 = ColumnParallelLinearPallas(in2, out2, bias=True, mxu_dtype=None, key=kp2)
    y2 = jax.block_until_ready(layer2(x2))
    y2_ref = (jnp.einsum("bsk,nk->bsn", x2, jnp.asarray(layer2.weight))
              + jnp.asarray(layer2.bias))
    assert y2.shape == (b2, s2, out2)
    assert jnp.allclose(y2, y2_ref, atol=1e-3, rtol=1e-3)

    # Case 3: default bf16 MXU fast path, forced multi-block grid (small tile
    # caps) to exercise the K-reduction accumulation and bias-in-init epilogue.
    b3, s3, in3, out3 = 2, 16, 256, 384
    x3 = jax.random.normal(k3, (b3, s3, in3), dtype=jnp.float32)
    layer3 = ColumnParallelLinearPallas(in3, out3, bias=True, key=kp3,
                                        tile_caps=(8, 128, 128))
    y3 = jax.block_until_ready(layer3(x3))
    w3_bf16 = jnp.asarray(layer3.weight).astype(jnp.bfloat16)
    y3_ref = (jnp.einsum("bsk,nk->bsn", x3.astype(jnp.bfloat16), w3_bf16,
                         preferred_element_type=jnp.float32)
              + jnp.asarray(layer3.bias))
    assert y3.shape == (b3, s3, out3)
    assert jnp.allclose(y3, y3_ref, atol=2e-2, rtol=2e-2)

    print("KERNEL_OK")
</pallas_src>

<mosaic_0001>
module attributes {stable_mosaic.version = 11 : i64} {
  func.func @kernel(%arg0: i32, %arg1: i32, %arg2: i32, %arg3: memref<16x128xf32, #tpu.memory_space<vmem>>, %arg4: memref<128x128xf32, #tpu.memory_space<vmem>>, %arg5: memref<16x128xf32, #tpu.memory_space<vmem>>) attributes {dimension_semantics = [#tpu.dimension_semantics<parallel>, #tpu.dimension_semantics<parallel>, #tpu.dimension_semantics<arbitrary>], iteration_bounds = array<i64: 1, 2, 1>, scalar_prefetch = 0 : i64, scratch_operands = 0 : i64, tpu.core_type = #tpu.core_type<tc>, window_params = [{transform_indices = @transform_0, window_bounds = array<i64: 16, 128>}, {transform_indices = @transform_1, window_bounds = array<i64: 128, 128>}, {transform_indices = @transform_2, window_bounds = array<i64: 16, 128>}]} {
    %c0_i32 = arith.constant 0 : i32
    %0 = arith.cmpi eq, %arg2, %c0_i32 : i32
    %1 = arith.extui %0 : i1 to i32
    %c0_i32_0 = arith.constant 0 : i32
    %2 = arith.cmpi ne, %1, %c0_i32_0 : i32
    scf.if %2 {
      %cst_8 = arith.constant 0.000000e+00 : f32
      %9 = vector.broadcast %cst_8 : f32 to vector<16x128xf32>
      %c0_9 = arith.constant 0 : index
      %c0_10 = arith.constant 0 : index
      %10 = vector.load %arg5[%c0_9, %c0_10] : memref<16x128xf32, #tpu.memory_space<vmem>>, vector<16x128xf32>
      tpu.vector_store %arg5[%c0_9, %c0_10], %9 {strides = array<i32>} : memref<16x128xf32, #tpu.memory_space<vmem>>, vector<16x128xf32>,
    } else {
    }
    %c0 = arith.constant 0 : index
    %c0_1 = arith.constant 0 : index
    %3 = vector.load %arg5[%c0, %c0_1] : memref<16x128xf32, #tpu.memory_space<vmem>>, vector<16x128xf32>
    %c0_2 = arith.constant 0 : index
    %c0_3 = arith.constant 0 : index
    %4 = vector.load %arg3[%c0_2, %c0_3] : memref<16x128xf32, #tpu.memory_space<vmem>>, vector<16x128xf32>
    %c0_4 = arith.constant 0 : index
    %c0_5 = arith.constant 0 : index
    %5 = vector.load %arg4[%c0_4, %c0_5] : memref<128x128xf32, #tpu.memory_space<vmem>>, vector<128x128xf32>
    %cst = arith.constant dense<0.000000e+00> : vector<16x128xf32>
    %6 = tpu.matmul %4, %5, %cst {dimension_numbers = #tpu.dot_dimension_numbers<[1], [0], [0], [1], [0, 0, 1, 1], [], []>} : vector<16x128xf32>, vector<128x128xf32>, vector<16x128xf32> -> vector<16x128xf32>
    %7 = arith.addf %3, %6 : vector<16x128xf32>
    %c0_6 = arith.constant 0 : index
    %c0_7 = arith.constant 0 : index
    %8 = vector.load %arg5[%c0_6, %c0_7] : memref<16x128xf32, #tpu.memory_space<vmem>>, vector<16x128xf32>
    tpu.vector_store %arg5[%c0_6, %c0_7], %7 {strides = array<i32>} : memref<16x128xf32, #tpu.memory_space<vmem>>, vector<16x128xf32>,
    return
  }
  func.func @transform_0(%arg0: i32, %arg1: i32, %arg2: i32) -> (i32, i32) {
    %c0_i32 = arith.constant 0 : i32
    return %arg0, %arg2 : i32, i32
  }
  func.func @transform_1(%arg0: i32, %arg1: i32, %arg2: i32) -> (i32, i32) {
    %c0_i32 = arith.constant 0 : i32
    return %arg2, %arg1 : i32, i32
  }
  func.func @transform_2(%arg0: i32, %arg1: i32, %arg2: i32) -> (i32, i32) {
    %c0_i32 = arith.constant 0 : i32
    return %arg0, %arg1 : i32, i32
  }
}

</mosaic_0001>

<llo_original>
// kernel: column_parallel_linear.1
$region0: #{column_parallel_linear.1}
  #allocation0 [shape = 'u32[]', space=smem, size = 0x4, offset = 0x4, fixed_abs, tag = 'smem constant byte address 0x4 - core index']
  #allocation1 [shape = 'u32[72,128]{1,0:T(1,128)}', space=vmem, size = 0x9000, scoped, tag = 'internal scratch']
  %s0 = inlined_call_operand.hbm [shape: f32[16,128], index: 0, kind: input, shape index: {}]
  %s1 = inlined_call_operand.hbm [shape: f32[128,256], index: 1, kind: input, shape index: {}]
  %s2 = inlined_call_operand.hbm [shape: f32[16,256], index: 2, kind: output, shape index: {}]
  %s3 = sld [smem:[#allocation0]]
  $region53: #{column_parallel_linear.1} parent=0
    _
  %s5 = ssub.s32 1, %s3
  %s6 = scalar_select 0, %s5, %s3
  $region1: #{column_parallel_linear.1} parent=0
    #allocation2 [shape = 'u8[8192]{0}', space=vmem, size = 0x2000, scoped, tag = 'input window, operand 0, single buffered']
    #allocation3 [shape = 's32[2]{0}', space=sflag, size = 0x8, scoped, tag = 'scoped memory for column_parallel_linear.1']
    #allocation4 [shape = 's32[2]{0}', space=sflag, size = 0x8, scoped, tag = 'scoped memory for column_parallel_linear.1']
    #allocation5 [shape = 'u8[131072]{0}', space=vmem, size = 0x20000, scoped, tag = 'input window, operand 1']
    #allocation6 [shape = 's32[2]{0}', space=sflag, size = 0x8, scoped, tag = 'scoped memory for column_parallel_linear.1']
    #allocation7 [shape = 'u8[16384]{0}', space=vmem, size = 0x4000, scoped, tag = 'output window, operand 0']
    %7 = vsyncpa [#allocation3], 0
    %8 = vsyncpa [#allocation6], 0
    %s9 = scalar_lea.sflag [#allocation6], 1
    %10 = vsyncpa %s9, 0
    %11 = vsyncpa [#allocation4], 0
    %s12 = scalar_lea.sflag [#allocation4], 1
    %13 = vsyncpa %s12, 0
    loop: start=0, step=1, limit=4
    $region2: #{column_parallel_linear.1} parent=1 // loop_pre_header
      _
    $region3: #{column_parallel_linear.1} parent=1 // loop_header
      %s15 = sphi 0, %s19
      %p16 = scmp.ge.s32.totalorder %s15, 4
      %s22 = sphi 0, %s41
      %s23 = sphi 0, %s37
      %s24 = sphi 0, %s33
      %s25 = sphi 0, %s22
      %s26 = sphi 0, %s23
      %s27 = sphi 0, %s24
      %s28 = sphi 0, %s25
      %s29 = sphi 0, %s26
      %s30 = sphi 0, %s27
      %s46 = sphi 0, %s48
      %s49 = sphi 0, %s46
      %s50 = sphi 0, %s49
      %s66 = sphi 0, %s50
      %s74 = sphi 0, %s76
      %s77 = sphi 0, %s74
      %s78 = sphi 0, %s77
      %s94 = sphi 0, %s78
      %s102 = sphi 0, %s104
      %s105 = sphi 0, %s102
      %s106 = sphi 0, %s105
      %s122 = sphi 0, %s106
    $region4: #{column_parallel_linear.1} parent=1 // loop_header_branch
      %18 = sbr.rel (%p16) target = $region8
    $region5: #{column_parallel_linear.1} parent=1 // loop_body
      %s20 = ssub.s32 %s15, 1
      %s21 = ssub.s32 %s15, 2
      %s31 = sadd.s32 1, %s24
      %p32 = scmp.ge.s32.totalorder %s31, 1
      %s33 = scalar_select %p32, 0, %s31
      %s34 = sadd.s32 1, %s23
      %s35 = scalar_select %p32, %s34, %s23
      %p36 = scmp.ge.s32.totalorder %s35, 2
      %s37 = scalar_select %p36, 0, %s35
      %s38 = sadd.s32 1, %s22
      %s39 = scalar_select %p36, %s38, %s22
      %p40 = scmp.ge.s32.totalorder %s39, 1
      %s41 = scalar_select %p40, 0, %s39
      %s42 = ssub.s32 %s22, %s41
      %s43 = ssub.s32 %s24, %s33
      %s44 = sor.u32 %s42, %s43
      %p45 = scmp.eq.s32.totalorder %s44, 0
      %s47 = sadd.s32 %s46, 1
      %s48 = scalar_select %p45, %s46, %s47
      %p51 = pneg %p45
      %p52 = scmp.eq.s32.totalorder %s15, 1
      %p53 = por %p51, %p52
      %p54 = scmp.ne.s32.totalorder %s46, %s49
      %p55 = scmp.eq.s32.totalorder %s15, 0
      %p56 = por %p54, %p55
      %p57 = scmp.ne.s32.totalorder %s46, %s49
      %p58 = scmp.eq.s32.totalorder %s20, 1
      %p59 = por %p57, %p58
      %p60 = scmp.ne.s32.totalorder %s49, %s50
      %p61 = scmp.eq.s32.totalorder %s20, 0
      %p62 = por %p60, %p61
      %p63 = scmp.ne.s32.totalorder %s49, %s50
      %p64 = scmp.eq.s32.totalorder %s21, 1
      %p65 = por %p63, %p64
      %p67 = scmp.ne.s32.totalorder %s50, %s66
      %p68 = scmp.eq.s32.totalorder %s21, 0
      %p69 = por %p67, %p68
      %s70 = ssub.s32 %s24, %s33
      %s71 = ssub.s32 %s23, %s37
      %s72 = sor.u32 %s70, %s71
      %p73 = scmp.eq.s32.totalorder %s72, 0
      %s75 = sadd.s32 %s74, 1
      %s76 = scalar_select %p73, %s74, %s75
      %p79 = pneg %p73
      %p80 = scmp.eq.s32.totalorder %s15, 1
      %p81 = por %p79, %p80
      %p82 = scmp.ne.s32.totalorder %s74, %s77
      %p83 = scmp.eq.s32.totalorder %s15, 0
      %p84 = por %p82, %p83
      %p85 = scmp.ne.s32.totalorder %s74, %s77
      %p86 = scmp.eq.s32.totalorder %s20, 1
      %p87 = por %p85, %p86
      %p88 = scmp.ne.s32.totalorder %s77, %s78
      %p89 = scmp.eq.s32.totalorder %s20, 0
      %p90 = por %p88, %p89
      %p91 = scmp.ne.s32.totalorder %s77, %s78
      %p92 = scmp.eq.s32.totalorder %s21, 1
      %p93 = por %p91, %p92
      %p95 = scmp.ne.s32.totalorder %s78, %s94
      %p96 = scmp.eq.s32.totalorder %s21, 0
      %p97 = por %p95, %p96
      %s98 = ssub.s32 %s22, %s41
      %s99 = ssub.s32 %s23, %s37
      %s100 = sor.u32 %s98, %s99
      %p101 = scmp.eq.s32.totalorder %s100, 0
      %s103 = sadd.s32 %s102, 1
      %s104 = scalar_select %p101, %s102, %s103
      %p107 = pneg %p101
      %p108 = scmp.eq.s32.totalorder %s15, 1
      %p109 = por %p107, %p108
      %p110 = scmp.ne.s32.totalorder %s102, %s105
      %p111 = scmp.eq.s32.totalorder %s15, 0
      %p112 = por %p110, %p111
      %p113 = scmp.ne.s32.totalorder %s102, %s105
      %p114 = scmp.eq.s32.totalorder %s20, 1
      %p115 = por %p113, %p114
      %p116 = scmp.ne.s32.totalorder %s105, %s106
      %p117 = scmp.eq.s32.totalorder %s20, 0
      %p118 = por %p116, %p117
      %p119 = scmp.ne.s32.totalorder %s105, %s106
      %p120 = scmp.eq.s32.totalorder %s21, 1
      %p121 = por %p119, %p120
      %p123 = scmp.ne.s32.totalorder %s106, %s122
      %p124 = scmp.eq.s32.totalorder %s21, 0
      %p125 = por %p123, %p124
      %p126 = scmp.le.s32.totalorder 1, %s15
      %p127 = scmp.lt.s32.totalorder %s15, 3
      %p128 = pnand %p126, %p127
      %p129 = pneg %p128
      // Predicated region
      $region9: #{column_parallel_linear.1} parent=5 // pred_check
        _
      $region10: #{column_parallel_linear.1} parent=5 // pred_check_branch
        %131 = sbr.rel (%p128) target = $region12
      $region11: #{column_parallel_linear.1} parent=5 // pred_region
        %s132 = ssub.s32 %s15, 1
        // Predicated region
        $region13: #{column_parallel_linear.1} parent=11 // pred_check
          %p133 = pneg %p62
        $region14: #{column_parallel_linear.1} parent=11 // pred_check_branch
          %135 = sbr.rel (%p133) target = $region16
        $region15: #{column_parallel_linear.1} parent=11 // pred_region
          %s136 = smul.u32 2, %s25
          %138 = vsyncadd [#allocation3], 0
          %s139 = sadd.s32 %s27, %s136
          %s140 = smul.addr %s139, 8
          %s141 = scalar_lea.hbm %s0, %s140
          %s142 = sshll.u32 %s141, 4
          %s143 = int_to_ptr.hbm [resolvable:$true] %s142
          %s144 = sshll.u32 [#allocation2], 4
          %s145 = int_to_ptr.vmem [resolvable:$true] %s144
          %150 = dma.hbm_to_vmem [thread:$0]  %s143, 256, %s145, [#allocation3], 128, 128, 8
        $region16: #{column_parallel_linear.1} parent=11 // pred_fallthru
          _
      $region12: #{column_parallel_linear.1} parent=5 // pred_fallthru
        _
      %p151 = scmp.lt.s32.totalorder %s15, 2
      // Predicated region
      $region17: #{column_parallel_linear.1} parent=5 // pred_check
        %p152 = pneg %p151
      $region18: #{column_parallel_linear.1} parent=5 // pred_check_branch
        %154 = sbr.rel (%p152) target = $region20
      $region19: #{column_parallel_linear.1} parent=5 // pred_region
        // Predicated region
        $region21: #{column_parallel_linear.1} parent=19 // pred_check
          %p155 = pneg %p84
        $region22: #{column_parallel_linear.1} parent=19 // pred_check_branch
          %157 = sbr.rel (%p155) target = $region24
        $region23: #{column_parallel_linear.1} parent=19 // pred_region
          %s158 = sand.u32 %s74, 1
          %s159 = scalar_lea.sflag [#allocation6], %s158
          %s160 = sand.u32 %s74, 1
          %s161 = smul.addr %s160, 128
          %s162 = scalar_lea.vmem [#allocation5], %s161
          %s163 = smul.u32 16, %s24
          %165 = vsyncadd %s159, 0
          %s166 = smul.addr %s163, 2
          %s167 = sadd.s32 %s23, %s166
          %s168 = smul.addr %s167, 8
          %s169 = scalar_lea.hbm %s1, %s168
          %s170 = sshll.u32 %s169, 4
          %s171 = int_to_ptr.hbm [resolvable:$true] %s170
          %s172 = sshll.u32 %s162, 4
          %s173 = int_to_ptr.vmem [resolvable:$true] %s172
          %178 = dma.hbm_to_vmem [thread:$0]  %s171, 2048, %s173, %s159, 256, 128, 8
        $region24: #{column_parallel_linear.1} parent=19 // pred_fallthru
          _
      $region20: #{column_parallel_linear.1} parent=5 // pred_fallthru
        _
      %p179 = scmp.le.s32.totalorder 1, %s15
      %p180 = scmp.lt.s32.totalorder %s15, 3
      %p181 = pnand %p179, %p180
      %p182 = pneg %p181
      // Predicated region
      $region25: #{column_parallel_linear.1} parent=5 // pred_check
        _
      $region26: #{column_parallel_linear.1} parent=5 // pred_check_branch
        %184 = sbr.rel (%p181) target = $region28
      $region27: #{column_parallel_linear.1} parent=5 // pred_region
        %s185 = ssub.s32 %s15, 1
        // Predicated region
        $region29: #{column_parallel_linear.1} parent=27 // pred_check
          %p186 = pneg %p62
        $region30: #{column_parallel_linear.1} parent=27 // pred_check_branch
          %188 = sbr.rel (%p186) target = $region32
        $region31: #{column_parallel_linear.1} parent=27 // pred_region
          %190 = dma.done [#allocation3], 256
        $region32: #{column_parallel_linear.1} parent=27 // pred_fallthru
          _
        %s191 = sand.u32 %s77, 1
        %s192 = scalar_lea.sflag [#allocation6], %s191
        %s193 = sand.u32 %s77, 1
        %s194 = smul.addr %s193, 128
        %s195 = scalar_lea.vmem [#allocation5], %s194
        // Predicated region
        $region33: #{column_parallel_linear.1} parent=27 // pred_check
          %p196 = pneg %p90
        $region34: #{column_parallel_linear.1} parent=27 // pred_check_branch
          %198 = sbr.rel (%p196) target = $region36
        $region35: #{column_parallel_linear.1} parent=27 // pred_region
          %200 = dma.done %s192, 2048
        $region36: #{column_parallel_linear.1} parent=27 // pred_fallthru
          _
        %p201 = pneg %p62
        %p202 = pneg %p59
        %s203 = sand.u32 %s77, 1
        %s204 = scalar_lea.sflag [#allocation6], %s203
        %s205 = sand.u32 %s77, 1
        %s206 = smul.addr %s205, 128
        %s207 = scalar_lea.vmem [#allocation5], %s206
        %p208 = pneg %p90
        %p209 = pneg %p87
        %p210 = pneg %p118
        %p211 = pneg %p115
        %s212 = sand.u32 %s105, 1
        %s213 = scalar_lea.sflag [#allocation4], %s212
        %s214 = sand.u32 %s105, 1
        %s215 = smul.addr %s214, 16
        %s216 = scalar_lea.vmem [#allocation7], %s215
        %s217 = smul.u32 2, %s25
        %s218 = smul.u32 16, %s27
        %s219 = smul.u32 2, %s25
        %p220 = scmp.eq.s32.totalorder %s27, 0
        // Predicated region
        $region37: #{column_parallel_linear.1} parent=27 // pred_check
          %p221 = pneg %p220
        $region38: #{column_parallel_linear.1} parent=27 // pred_check_branch
          %223 = sbr.rel (%p221) target = $region40
        $region39: #{column_parallel_linear.1} parent=27 // pred_region
          %224 = vst [vmem:[%s216] sm:$0xff] 0.0
          %225 = vst [vmem:[%s216 + $0x8] sm:$0xff] 0.0
        $region40: #{column_parallel_linear.1} parent=27 // pred_fallthru
          _
        %v226 = vld [vmem:[%s216] sm:$0xff]
        %v227 = vld [vmem:[%s216 + $0x8] sm:$0xff]
        %v228 = vld [vmem:[#allocation2] sm:$0xff]
        %v229 = vld [vmem:[#allocation2 + $0x8] sm:$0xff]
        %v230 = vld [vmem:[%s195] sm:$0xff]
        %v231 = vld [vmem:[%s195 + $0x8] sm:$0xff]
        %v232 = vld [vmem:[%s195 + $0x10] sm:$0xff]
        %v233 = vld [vmem:[%s195 + $0x18] sm:$0xff]
        %v234 = vld [vmem:[%s195 + $0x20] sm:$0xff]
        %v235 = vld [vmem:[%s195 + $0x28] sm:$0xff]
        %v236 = vld [vmem:[%s195 + $0x30] sm:$0xff]
        %v237 = vld [vmem:[%s195 + $0x38] sm:$0xff]
        %v238 = vld [vmem:[%s195 + $0x40] sm:$0xff]
        %v239 = vld [vmem:[%s195 + $0x48] sm:$0xff]
        %v240 = vld [vmem:[%s195 + $0x50] sm:$0xff]
        %v241 = vld [vmem:[%s195 + $0x58] sm:$0xff]
        %v242 = vld [vmem:[%s195 + $0x60] sm:$0xff]
        %v243 = vld [vmem:[%s195 + $0x68] sm:$0xff]
        %v244 = vld [vmem:[%s195 + $0x70] sm:$0xff]
        %v245 = vld [vmem:[%s195 + $0x78] sm:$0xff]
        %246 = vmatpush.msra.mxu0 %v245
        %247 = vmatpush.msra.mxu0 %v244
        %248 = vmatpush.msra.mxu0 %v243
        %249 = vmatpush.msra.mxu0 %v242
        %250 = vmatpush.msra.mxu0 %v241
        %251 = vmatpush.msra.mxu0 %v240
        %252 = vmatpush.msra.mxu0 %v239
        %253 = vmatpush.msra.mxu0 %v238
        %254 = vmatpush.msra.mxu0 %v237
        %255 = vmatpush.msra.mxu0 %v236
        %256 = vmatpush.msra.mxu0 %v235
        %257 = vmatpush.msra.mxu0 %v234
        %258 = vmatpush.msra.mxu0 %v233
        %259 = vmatpush.msra.mxu0 %v232
        %260 = vmatpush.msra.mxu0 %v231
        %261 = vmatpush.msra.mxu0 %v230
        %262 = vmatmul.f32.gmra.mxu0 %v228
        %v263 = vpop.f32.mrf.mxu0
        %v264 = vadd.f32 0.0, %v263
        %265 = vmatmul.f32.gmra.mxu0 %v229
        %v266 = vpop.f32.mrf.mxu0
        %v267 = vadd.f32 0.0, %v266
        %268 = vdwg.mxu0
        %v269 = vadd.f32 %v226, %v264
        %v270 = vadd.f32 %v227, %v267
        %271 = vst [vmem:[%s216] sm:$0xff] %v269
        %272 = vst [vmem:[%s216 + $0x8] sm:$0xff] %v270
        %s273 = sand.u32 %s105, 1
        %s274 = scalar_lea.sflag [#allocation4], %s273
        %s275 = sand.u32 %s105, 1
        %s276 = smul.addr %s275, 16
        %s277 = scalar_lea.vmem [#allocation7], %s276
        // Predicated region
        $region41: #{column_parallel_linear.1} parent=27 // pred_check
          %p278 = pneg %p115
        $region42: #{column_parallel_linear.1} parent=27 // pred_check_branch
          %280 = sbr.rel (%p278) target = $region44
        $region43: #{column_parallel_linear.1} parent=27 // pred_region
          %s281 = smul.u32 2, %s25
          %283 = vsyncadd %s274, 0
          %s284 = smul.addr %s281, 2
          %s285 = sadd.s32 %s26, %s284
          %s286 = smul.addr %s285, 8
          %s287 = scalar_lea.hbm %s2, %s286
          %s288 = sshll.u32 %s277, 4
          %s289 = int_to_ptr.vmem [resolvable:$true] %s288
          %s290 = sshll.u32 %s287, 4
          %s291 = int_to_ptr.hbm [resolvable:$true] %s290
          %296 = dma.vmem_to_hbm [thread:$0]  %s289, 256, %s291, %s274, 128, 256, 8
        $region44: #{column_parallel_linear.1} parent=27 // pred_fallthru
          _
      $region28: #{column_parallel_linear.1} parent=5 // pred_fallthru
        _
      %p297 = scmp.le.s32.totalorder 2, %s15
      // Predicated region
      $region45: #{column_parallel_linear.1} parent=5 // pred_check
        %p298 = pneg %p297
      $region46: #{column_parallel_linear.1} parent=5 // pred_check_branch
        %300 = sbr.rel (%p298) target = $region48
      $region47: #{column_parallel_linear.1} parent=5 // pred_region
        %s301 = ssub.s32 %s15, 2
        // Predicated region
        $region49: #{column_parallel_linear.1} parent=47 // pred_check
          %p302 = pneg %p121
        $region50: #{column_parallel_linear.1} parent=47 // pred_check_branch
          %304 = sbr.rel (%p302) target = $region52
        $region51: #{column_parallel_linear.1} parent=47 // pred_region
          %s305 = sand.u32 %s106, 1
          %s306 = scalar_lea.sflag [#allocation4], %s305
          %s307 = sand.u32 %s106, 1
          %s308 = smul.addr %s307, 16
          %s309 = scalar_lea.vmem [#allocation7], %s308
          %311 = dma.done %s306, 256
        $region52: #{column_parallel_linear.1} parent=47 // pred_fallthru
          _
      $region48: #{column_parallel_linear.1} parent=5 // pred_fallthru
        _
    $region6: #{column_parallel_linear.1} parent=1 // loop_footer
      %s19 = sadd.s32 1, %s15
    $region7: #{column_parallel_linear.1} parent=1 // loop_footer_branch
      %14 = sbr.rel target = $region3
    $region8: #{column_parallel_linear.1} parent=1 // loop_exit
      _
    %312 = vsyncpa [#allocation3], 1
    %s313 = scalar_lea.sflag [#allocation3], 1
    %314 = vsyncpa %s313, 1
    %315 = vsyncpa [#allocation6], 1
    %s316 = scalar_lea.sflag [#allocation6], 1
    %317 = vsyncpa %s316, 1
    %318 = vsyncpa [#allocation4], 1
    %s319 = scalar_lea.sflag [#allocation4], 1
    %320 = vsyncpa %s319, 1

</llo_original>
